<compile_context>
chip_gen: v5e
topology: v5e:2x2
jax: 0.10.0
libtpu: 0.0.40
codegen_flags: <defaults>
</compile_context>

<pallas_src>
import jax
import jax.numpy as jnp
from jax.experimental import pallas as pl
from jax.experimental.pallas import tpu as pltpu


def _fused_conv_sigmoid_kernel(x_ref, w1_ref, b1_ref, w2_ref, b2_ref, o_ref):
    x = x_ref[...]        # (Cin,  P)  channels on sublanes, pixels on lanes
    w1 = w1_ref[...]      # (Cout, Cin)
    b1 = b1_ref[...]      # (Cout, 1)
    w2 = w2_ref[...]      # (Cout, Cout)
    b2 = b2_ref[...]      # (Cout, 1)

    cin = w1.shape[1]

    # ---- layer 1 (K = 3): unrolled VPU broadcast-FMAs, bias-seeded accumulator.
    acc1 = b1 + w1[:, 0:1] * x[0:1, :]
    for k in range(1, cin):
        acc1 = acc1 + w1[:, k:k + 1] * x[k:k + 1, :]
    y1 = jax.nn.sigmoid(acc1)                       # (Cout, P), stays in VMEM

    # ---- layer 2 (K = 16): single small MXU matmul, f32-accurate.
    acc2 = jnp.dot(w2, y1,
                   preferred_element_type=jnp.float32,
                   precision=jax.lax.Precision.HIGHEST) + b2
    o_ref[...] = jax.nn.sigmoid(acc2).astype(o_ref.dtype)


@jax.jit
def model_forward(x_nchw, w1, b1, w2, b2):
    """x: (N, Cin, H, W); w1: (Cout, Cin); w2: (Cout, Cout); b*: (Cout,)."""
    n, cin, h, w = x_nchw.shape
    cout = w1.shape[0]
    ho, wo = h + 4, w + 4
    p = h * w                       # 256 = 2 full lane tiles (lane-dense)

    x_flat = x_nchw.reshape(n, cin, p)     # free reshape: no pad, no copy
    b1c = b1.reshape(cout, 1)
    b2c = b2.reshape(cout, 1)

    # TODO(synk): for N >> 1, block several images per grid step
    # (block_shape (B_blk, cin, p) with grid=(pl.cdiv(n, B_blk),)) to amortize
    # the ~0.35us per-step overhead; at N=1 a single step is already optimal.
    interior = pl.pallas_call(
        _fused_conv_sigmoid_kernel,
        out_shape=jax.ShapeDtypeStruct((n, cout, p), jnp.float32),
        grid_spec=pltpu.PrefetchScalarGridSpec(
            num_scalar_prefetch=0,
            grid=(n,),                                   # one step per image
            in_specs=[
                pl.BlockSpec((None, cin, p), lambda i: (i, 0, 0)),   # squeezed batch
                pl.BlockSpec((cout, cin), lambda i: (0, 0)),
                pl.BlockSpec((cout, 1), lambda i: (0, 0)),
                pl.BlockSpec((cout, cout), lambda i: (0, 0)),
                pl.BlockSpec((cout, 1), lambda i: (0, 0)),
            ],
            out_specs=pl.BlockSpec((None, cout, p), lambda i: (i, 0, 0)),
        ),
        compiler_params=pltpu.CompilerParams(
            dimension_semantics=("parallel",),
        ),
    )(x_flat, w1, b1c, w2, b2c)

    # Channel-constant border rings, filled outside the kernel (pure broadcasts).
    ring1 = jax.nn.sigmoid(b2)                                        # outermost
    ring2 = jax.nn.sigmoid(
        jnp.dot(w2, jax.nn.sigmoid(b1),
                precision=jax.lax.Precision.HIGHEST) + b2)            # second ring

    out = jnp.broadcast_to(ring1[None, :, None, None], (n, cout, ho, wo))
    out = out.at[:, :, 1:-1, 1:-1].set(
        jnp.broadcast_to(ring2[None, :, None, None], (n, cout, ho - 2, wo - 2)))
    out = out.at[:, :, 2:-2, 2:-2].set(interior.reshape(n, cout, h, w))
    return out


def _reference(x_nchw, w1, b1, w2, b2):
    # Pure-JAX reference: 1x1 conv == per-pixel channel matmul; padding=1 grows
    # each spatial dim by 2.  HIGHEST precision keeps the reference f32-exact.
    def step(x, w, b):
        xp = jnp.pad(x, ((0, 0), (0, 0), (1, 1), (1, 1)))
        y = jnp.einsum("nchw,oc->nohw", xp, w,
                       precision=jax.lax.Precision.HIGHEST)
        return jax.nn.sigmoid(y + b[None, :, None, None])

    return step(step(x_nchw, w1, b1), w2, b2)


if __name__ == "__main__":
    in_channels, out_channels = 3, 16
    N, H, W = 1, 16, 16

    key = jax.random.PRNGKey(0)
    k_x, k_w1, k_b1, k_w2, k_b2 = jax.random.split(key, 5)

    x = jax.random.normal(k_x, (N, in_channels, H, W), dtype=jnp.float32)
    # PyTorch Conv2d weight (out, in, 1, 1) stored squeezed as (out, in).
    w1 = jax.random.normal(k_w1, (out_channels, in_channels), jnp.float32) * 0.1
    b1 = jax.random.normal(k_b1, (out_channels,), jnp.float32) * 0.1
    w2 = jax.random.normal(k_w2, (out_channels, out_channels), jnp.float32) * 0.1
    b2 = jax.random.normal(k_b2, (out_channels,), jnp.float32) * 0.1

    out = jax.block_until_ready(model_forward(x, w1, b1, w2, b2))
    assert out.shape == (N, out_channels, H + 4, W + 4), out.shape

    ref = jax.block_until_ready(_reference(x, w1, b1, w2, b2))
    max_err = float(jnp.max(jnp.abs(out - ref)))
    assert jnp.allclose(out, ref, atol=1e-5, rtol=1e-5), max_err

    print("KERNEL_OK")
</pallas_src>

<mosaic_0001>
module attributes {stable_mosaic.version = 11 : i64} {
  func.func @_fused_conv_sigmoid_kernel(%arg0: i32, %arg1: memref<1x3x256xf32, #tpu.memory_space<vmem>>, %arg2: memref<16x3xf32, #tpu.memory_space<vmem>>, %arg3: memref<16x1xf32, #tpu.memory_space<vmem>>, %arg4: memref<16x16xf32, #tpu.memory_space<vmem>>, %arg5: memref<16x1xf32, #tpu.memory_space<vmem>>, %arg6: memref<1x16x256xf32, #tpu.memory_space<vmem>>) attributes {dimension_semantics = [#tpu.dimension_semantics<parallel>], iteration_bounds = array<i64: 1>, scalar_prefetch = 0 : i64, scratch_operands = 0 : i64, tpu.core_type = #tpu.core_type<tc>, window_params = [{transform_indices = @transform_0, window_bounds = array<i64: 1, 3, 256>}, {pipeline_mode = #tpu.pipeline_mode<synchronous>, transform_indices = @transform_1, window_bounds = array<i64: 16, 3>}, {pipeline_mode = #tpu.pipeline_mode<synchronous>, transform_indices = @transform_2, window_bounds = array<i64: 16, 1>}, {pipeline_mode = #tpu.pipeline_mode<synchronous>, transform_indices = @transform_3, window_bounds = array<i64: 16, 16>}, {pipeline_mode = #tpu.pipeline_mode<synchronous>, transform_indices = @transform_4, window_bounds = array<i64: 16, 1>}, {transform_indices = @transform_5, window_bounds = array<i64: 1, 16, 256>}]} {
    %c0 = arith.constant 0 : index
    %c0_0 = arith.constant 0 : index
    %c0_1 = arith.constant 0 : index
    %0 = vector.load %arg1[%c0, %c0_0, %c0_1] : memref<1x3x256xf32, #tpu.memory_space<vmem>>, vector<1x3x256xf32>
    %1 = vector.shape_cast %0 : vector<1x3x256xf32> to vector<3x256xf32>
    %c0_2 = arith.constant 0 : index
    %c0_3 = arith.constant 0 : index
    %2 = vector.load %arg2[%c0_2, %c0_3] : memref<16x3xf32, #tpu.memory_space<vmem>>, vector<16x3xf32>
    %c0_4 = arith.constant 0 : index
    %c0_5 = arith.constant 0 : index
    %3 = vector.load %arg3[%c0_4, %c0_5] : memref<16x1xf32, #tpu.memory_space<vmem>>, vector<16x1xf32>
    %c0_6 = arith.constant 0 : index
    %c0_7 = arith.constant 0 : index
    %4 = vector.load %arg4[%c0_6, %c0_7] : memref<16x16xf32, #tpu.memory_space<vmem>>, vector<16x16xf32>
    %c0_8 = arith.constant 0 : index
    %c0_9 = arith.constant 0 : index
    %5 = vector.load %arg5[%c0_8, %c0_9] : memref<16x1xf32, #tpu.memory_space<vmem>>, vector<16x1xf32>
    %6 = vector.extract_strided_slice %2 {offsets = [0, 0], sizes = [16, 1], strides = [1, 1]} : vector<16x3xf32> to vector<16x1xf32>
    %7 = vector.extract_strided_slice %1 {offsets = [0, 0], sizes = [1, 256], strides = [1, 1]} : vector<3x256xf32> to vector<1x256xf32>
    %8 = vector.broadcast %6 : vector<16x1xf32> to vector<16x256xf32>
    %9 = vector.broadcast %7 : vector<1x256xf32> to vector<16x256xf32>
    %10 = arith.mulf %8, %9 : vector<16x256xf32>
    %11 = vector.broadcast %3 : vector<16x1xf32> to vector<16x256xf32>
    %12 = arith.addf %11, %10 : vector<16x256xf32>
    %13 = vector.extract_strided_slice %2 {offsets = [0, 1], sizes = [16, 1], strides = [1, 1]} : vector<16x3xf32> to vector<16x1xf32>
    %14 = vector.extract_strided_slice %1 {offsets = [1, 0], sizes = [1, 256], strides = [1, 1]} : vector<3x256xf32> to vector<1x256xf32>
    %15 = vector.broadcast %13 : vector<16x1xf32> to vector<16x256xf32>
    %16 = vector.broadcast %14 : vector<1x256xf32> to vector<16x256xf32>
    %17 = arith.mulf %15, %16 : vector<16x256xf32>
    %18 = arith.addf %12, %17 : vector<16x256xf32>
    %19 = vector.extract_strided_slice %2 {offsets = [0, 2], sizes = [16, 1], strides = [1, 1]} : vector<16x3xf32> to vector<16x1xf32>
    %20 = vector.extract_strided_slice %1 {offsets = [2, 0], sizes = [1, 256], strides = [1, 1]} : vector<3x256xf32> to vector<1x256xf32>
    %21 = vector.broadcast %19 : vector<16x1xf32> to vector<16x256xf32>
    %22 = vector.broadcast %20 : vector<1x256xf32> to vector<16x256xf32>
    %23 = arith.mulf %21, %22 : vector<16x256xf32>
    %24 = arith.addf %18, %23 : vector<16x256xf32>
    %25 = arith.negf %24 : vector<16x256xf32>
    %26 = math.exp %25 : vector<16x256xf32>
    %cst = arith.constant 1.000000e+00 : f32
    %27 = vector.broadcast %cst : f32 to vector<16x256xf32>
    %28 = arith.addf %27, %26 : vector<16x256xf32>
    %29 = arith.divf %27, %28 : vector<16x256xf32>
    %cst_10 = arith.constant dense<0.000000e+00> : vector<16x256xf32>
    %30 = tpu.matmul %4, %29, %cst_10 {dimension_numbers = #tpu.dot_dimension_numbers<[1], [0], [0], [1], [0, 0, 1, 1], [], []>, precision = #tpu.contract_precision<fp32>} : vector<16x16xf32>, vector<16x256xf32>, vector<16x256xf32> -> vector<16x256xf32>
    %31 = vector.broadcast %5 : vector<16x1xf32> to vector<16x256xf32>
    %32 = arith.addf %30, %31 : vector<16x256xf32>
    %33 = arith.negf %32 : vector<16x256xf32>
    %34 = math.exp %33 : vector<16x256xf32>
    %cst_11 = arith.constant 1.000000e+00 : f32
    %35 = vector.broadcast %cst_11 : f32 to vector<16x256xf32>
    %36 = arith.addf %35, %34 : vector<16x256xf32>
    %37 = arith.divf %35, %36 : vector<16x256xf32>
    %c0_12 = arith.constant 0 : index
    %c0_13 = arith.constant 0 : index
    %c0_14 = arith.constant 0 : index
    %38 = vector.load %arg6[%c0_12, %c0_13, %c0_14] : memref<1x16x256xf32, #tpu.memory_space<vmem>>, vector<1x16x256xf32>
    %39 = vector.shape_cast %38 : vector<1x16x256xf32> to vector<16x256xf32>
    %40 = vector.shape_cast %37 : vector<16x256xf32> to vector<1x16x256xf32>
    tpu.vector_store %arg6[%c0_12, %c0_13, %c0_14], %40 {strides = array<i32>} : memref<1x16x256xf32, #tpu.memory_space<vmem>>, vector<1x16x256xf32>,
    return
  }
  func.func @transform_0(%arg0: i32) -> (i32, i32, i32) {
    %c0_i32 = arith.constant 0 : i32
    %c0_i32_0 = arith.constant 0 : i32
    %c0_i32_1 = arith.constant 0 : i32
    return %arg0, %c0_i32, %c0_i32_0 : i32, i32, i32
  }
  func.func @transform_1(%arg0: i32) -> (i32, i32) {
    %c0_i32 = arith.constant 0 : i32
    %c0_i32_0 = arith.constant 0 : i32
    %c0_i32_1 = arith.constant 0 : i32
    return %c0_i32, %c0_i32_0 : i32, i32
  }
  func.func @transform_2(%arg0: i32) -> (i32, i32) {
    %c0_i32 = arith.constant 0 : i32
    %c0_i32_0 = arith.constant 0 : i32
    %c0_i32_1 = arith.constant 0 : i32
    return %c0_i32, %c0_i32_0 : i32, i32
  }
  func.func @transform_3(%arg0: i32) -> (i32, i32) {
    %c0_i32 = arith.constant 0 : i32
    %c0_i32_0 = arith.constant 0 : i32
    %c0_i32_1 = arith.constant 0 : i32
    return %c0_i32, %c0_i32_0 : i32, i32
  }
  func.func @transform_4(%arg0: i32) -> (i32, i32) {
    %c0_i32 = arith.constant 0 : i32
    %c0_i32_0 = arith.constant 0 : i32
    %c0_i32_1 = arith.constant 0 : i32
    return %c0_i32, %c0_i32_0 : i32, i32
  }
  func.func @transform_5(%arg0: i32) -> (i32, i32, i32) {
    %c0_i32 = arith.constant 0 : i32
    %c0_i32_0 = arith.constant 0 : i32
    %c0_i32_1 = arith.constant 0 : i32
    return %arg0, %c0_i32, %c0_i32_0 : i32, i32, i32
  }
}

</mosaic_0001>

<llo_original>
// kernel: model_forward.1
$region0: #{model_forward.1}
  #allocation0 [shape = 'u32[]', space=smem, size = 0x4, offset = 0x4, fixed_abs, tag = 'smem constant byte address 0x4 - core index']
  #allocation1 [shape = 'u32[72,128]{1,0:T(1,128)}', space=vmem, size = 0x9000, scoped, tag = 'internal scratch']
  %s0 = inlined_call_operand.vmem [shape: f32[1,3,256], index: 0, kind: input, shape index: {}]
  %s1 = inlined_call_operand.vmem [shape: f32[16,3], index: 1, kind: input, shape index: {}]
  %s2 = inlined_call_operand.vmem [shape: f32[16,1], index: 2, kind: input, shape index: {}]
  %s3 = inlined_call_operand.vmem [shape: f32[16,16], index: 3, kind: input, shape index: {}]
  %s4 = inlined_call_operand.vmem [shape: f32[16,1], index: 4, kind: input, shape index: {}]
  %s5 = inlined_call_operand.vmem [shape: f32[1,16,256], index: 5, kind: output, shape index: {}]
  %s6 = sld [smem:[#allocation0]]
  $region30: #{model_forward.1} parent=0
    _
  %s8 = ssub.s32 1, %s6
  %s9 = scalar_select 0, %s8, %s6
  // Predicated region
  $region2: #{model_forward.1} parent=0 // pred_check
    _
  $region3: #{model_forward.1} parent=0 // pred_check_branch
    %11 = sbr.rel (0) target = $region5
  $region4: #{model_forward.1} parent=0 // pred_region
    _
  $region5: #{model_forward.1} parent=0 // pred_fallthru
    _
  // Predicated region
  $region6: #{model_forward.1} parent=0 // pred_check
    _
  $region7: #{model_forward.1} parent=0 // pred_check_branch
    %13 = sbr.rel (0) target = $region9
  $region8: #{model_forward.1} parent=0 // pred_region
    _
  $region9: #{model_forward.1} parent=0 // pred_fallthru
    _
  // Predicated region
  $region10: #{model_forward.1} parent=0 // pred_check
    _
  $region11: #{model_forward.1} parent=0 // pred_check_branch
    %15 = sbr.rel (0) target = $region13
  $region12: #{model_forward.1} parent=0 // pred_region
    _
  $region13: #{model_forward.1} parent=0 // pred_fallthru
    _
  // Predicated region
  $region14: #{model_forward.1} parent=0 // pred_check
    _
  $region15: #{model_forward.1} parent=0 // pred_check_branch
    %17 = sbr.rel (0) target = $region17
  $region16: #{model_forward.1} parent=0 // pred_region
    _
  $region17: #{model_forward.1} parent=0 // pred_fallthru
    _
  // Predicated region
  $region18: #{model_forward.1} parent=0 // pred_check
    _
  $region19: #{model_forward.1} parent=0 // pred_check_branch
    %19 = sbr.rel (0) target = $region21
  $region20: #{model_forward.1} parent=0 // pred_region
    _
  $region21: #{model_forward.1} parent=0 // pred_fallthru
    _
  %v20 = vld [vmem:[%s0] sm:$0x77]
  %v21 = vld [vmem:[%s1] sm:$0xff]
  %v22 = vld [vmem:[%s1 + $0x8] sm:$0xff]
  %v23 = vld [vmem:[%s2] sm:$0xff]
  %v24 = vld [vmem:[%s2 + $0x8] sm:$0xff]
  %v25 = vld [vmem:[%s3] sm:$0xff]
  %v26 = vld [vmem:[%s3 + $0x8] sm:$0xff]
  %v27 = vld [vmem:[%s4] sm:$0xff]
  %v28 = vld [vmem:[%s4 + $0x8] sm:$0xff]
  %30 = vset.pattern.permute.xlu0 0
  %31 = vperm.xlu0 %30, %v21
  %v32 = vpop.permute.xlu0 %31
  %35 = vset.pattern.permute.xlu0 0
  %36 = vperm.xlu0 %35, %v22
  %v37 = vpop.permute.xlu0 %36
  %v40 = vperm.slane %v20, 0
  %v41 = vperm.slane %v20, 4
  %v44 = vperm.slane %v40, 0
  %v45 = vperm.slane %v41, 0
  %v46 = vmul.f32 %v32, %v44
  %v47 = vmul.f32 %v32, %v45
  %v48 = vmul.f32 %v37, %v44
  %v49 = vmul.f32 %v37, %v45
  %51 = vset.pattern.permute.xlu0 0
  %52 = vperm.xlu0 %51, %v23
  %v53 = vpop.permute.xlu0 %52
  %56 = vset.pattern.permute.xlu0 0
  %57 = vperm.xlu0 %56, %v24
  %v58 = vpop.permute.xlu0 %57
  %v60 = vadd.f32 %v53, %v46
  %v61 = vadd.f32 %v53, %v47
  %v62 = vadd.f32 %v58, %v48
  %v63 = vadd.f32 %v58, %v49
  %64 = vset.pattern.permute.xlu0 1
  %65 = vperm.xlu0 %64, %v21
  %v66 = vpop.permute.xlu0 %65
  %68 = vset.pattern.permute.xlu0 1
  %69 = vperm.xlu0 %68, %v22
  %v70 = vpop.permute.xlu0 %69
  %v72 = vperm.slane %v20, 1
  %v73 = vperm.slane %v20, 5
  %v76 = vperm.slane %v72, 1
  %v77 = vperm.slane %v73, 1
  %v78 = vmul.f32 %v66, %v76
  %v79 = vmul.f32 %v66, %v77
  %v80 = vmul.f32 %v70, %v76
  %v81 = vmul.f32 %v70, %v77
  %v82 = vadd.f32 %v60, %v78
  %v83 = vadd.f32 %v61, %v79
  %v84 = vadd.f32 %v62, %v80
  %v85 = vadd.f32 %v63, %v81
  %86 = vset.pattern.permute.xlu0 2
  %87 = vperm.xlu0 %86, %v21
  %v88 = vpop.permute.xlu0 %87
  %90 = vset.pattern.permute.xlu0 2
  %91 = vperm.xlu0 %90, %v22
  %v92 = vpop.permute.xlu0 %91
  %v94 = vperm.slane %v20, 2
  %v95 = vperm.slane %v20, 6
  %v98 = vperm.slane %v94, 2
  %v99 = vperm.slane %v95, 2
  %v100 = vmul.f32 %v88, %v98
  %v101 = vmul.f32 %v88, %v99
  %v102 = vmul.f32 %v92, %v98
  %v103 = vmul.f32 %v92, %v99
  %v104 = vadd.f32 %v82, %v100
  %v105 = vadd.f32 %v83, %v101
  %v106 = vadd.f32 %v84, %v102
  %v107 = vadd.f32 %v85, %v103
  %v108 = vxor.u32 %v104, 2147483648
  %v109 = vxor.u32 %v105, 2147483648
  %v110 = vxor.u32 %v106, 2147483648
  %v111 = vxor.u32 %v107, 2147483648
  %v112 = vmul.f32 %v108, 1.442695
  %v113 = vpow.pop %v112
  %v114 = vmul.f32 %v109, 1.442695
  %v115 = vpow.pop %v114
  %v116 = vmul.f32 %v110, 1.442695
  %v117 = vpow.pop %v116
  %v118 = vmul.f32 %v111, 1.442695
  %v119 = vpow.pop %v118
  %v120 = vadd.f32 %v113, 1.0
  %v121 = vadd.f32 %v115, 1.0
  %v122 = vadd.f32 %v117, 1.0
  %v123 = vadd.f32 %v119, 1.0
  %v124 = vrcp.pop %v120
  %v125 = vmul.f32 %v120, %v124
  %v126 = vsub.f32 1.0, %v125
  %v127 = vmul.f32 %v124, %v126
  %v128 = vadd.f32 %v124, %v127
  %vm129 = vweird.f32 %v120
  %vm130 = vweird.f32 %v124
  %vm131 = vmor %vm129, %vm130
  %v132 = vsel %vm131, %v124, %v128
  %v133 = vand.u32 2147483647, %v120
  %vm134 = vcmp.eq.f32.partialorder %v133, 8.507059e+37
  %v135 = vand.u32 %v120, 2147483648
  %v136 = vor.u32 1.1754944e-38, %v135
  %v137 = vsel %vm134, %v136, %v132
  %v138 = vmul.f32 1.0, %v137
  %v139 = vrcp.pop %v121
  %v140 = vmul.f32 %v121, %v139
  %v141 = vsub.f32 1.0, %v140
  %v142 = vmul.f32 %v139, %v141
  %v143 = vadd.f32 %v139, %v142
  %vm144 = vweird.f32 %v121
  %vm145 = vweird.f32 %v139
  %vm146 = vmor %vm144, %vm145
  %v147 = vsel %vm146, %v139, %v143
  %v148 = vand.u32 2147483647, %v121
  %vm149 = vcmp.eq.f32.partialorder %v148, 8.507059e+37
  %v150 = vand.u32 %v121, 2147483648
  %v151 = vor.u32 1.1754944e-38, %v150
  %v152 = vsel %vm149, %v151, %v147
  %v153 = vmul.f32 1.0, %v152
  %v154 = vrcp.pop %v122
  %v155 = vmul.f32 %v122, %v154
  %v156 = vsub.f32 1.0, %v155
  %v157 = vmul.f32 %v154, %v156
  %v158 = vadd.f32 %v154, %v157
  %vm159 = vweird.f32 %v122
  %vm160 = vweird.f32 %v154
  %vm161 = vmor %vm159, %vm160
  %v162 = vsel %vm161, %v154, %v158
  %v163 = vand.u32 2147483647, %v122
  %vm164 = vcmp.eq.f32.partialorder %v163, 8.507059e+37
  %v165 = vand.u32 %v122, 2147483648
  %v166 = vor.u32 1.1754944e-38, %v165
  %v167 = vsel %vm164, %v166, %v162
  %v168 = vmul.f32 1.0, %v167
  %v169 = vrcp.pop %v123
  %v170 = vmul.f32 %v123, %v169
  %v171 = vsub.f32 1.0, %v170
  %v172 = vmul.f32 %v169, %v171
  %v173 = vadd.f32 %v169, %v172
  %vm174 = vweird.f32 %v123
  %vm175 = vweird.f32 %v169
  %vm176 = vmor %vm174, %vm175
  %v177 = vsel %vm176, %v169, %v173
  %v178 = vand.u32 2147483647, %v123
  %vm179 = vcmp.eq.f32.partialorder %v178, 8.507059e+37
  %v180 = vand.u32 %v123, 2147483648
  %v181 = vor.u32 1.1754944e-38, %v180
  %v182 = vsel %vm179, %v181, %v177
  %v183 = vmul.f32 1.0, %v182
  %185 = vset.pattern.permute.xlu0 0
  %186 = vperm.xlu0 %185, %v27
  %v187 = vpop.permute.xlu0 %186
  %190 = vset.pattern.permute.xlu0 0
  %191 = vperm.xlu0 %190, %v28
  %v192 = vpop.permute.xlu0 %191
  %vm194 = vcmask 130048
  %v196 = vsel %vm194, %v25, 0
  %v199 = vsel %vm194, %v26, 0
  %201 = vmatpush.msra.mxu0 0.0
  %202 = vmatpush.msra.mxu0 0.0
  %203 = vmatpush.msra.mxu0 0.0
  %204 = vmatpush.msra.mxu0 0.0
  %205 = vmatpush.msra.mxu0 0.0
  %206 = vmatpush.msra.mxu0 0.0
  %207 = vmatpush.msra.mxu0 0.0
  %208 = vmatpush.msra.mxu0 0.0
  %209 = vmatpush.msra.mxu0 0.0
  %210 = vmatpush.msra.mxu0 0.0
  %211 = vmatpush.msra.mxu0 0.0
  %212 = vmatpush.msra.mxu0 0.0
  %213 = vmatpush.msra.mxu0 0.0
  %214 = vmatpush.msra.mxu0 0.0
  %v215 = vand.u32 %v168, 4294901760
  %216 = vmatpush.msra.mxu0 %v215
  %v217 = vand.u32 %v138, 4294901760
  %218 = vmatpush.msra.mxu0 %v217
  %v219 = vand.u32 %v196, 4294901760
  %v220 = vsub.f32 %v196, %v219
  %v221 = vand.u32 %v220, 4294901760
  %v222 = vsub.f32 %v220, %v221
  %v223 = vand.u32 %v222, 4294901760
  %224 = vmatmul.f32.gmra.mxu0 %v223
  %v225 = vpop.f32.mrf.mxu0
  %v226 = vadd.f32 %v187, %v225
  %v227 = vand.u32 %v199, 4294901760
  %v228 = vsub.f32 %v199, %v227
  %v229 = vand.u32 %v228, 4294901760
  %v230 = vsub.f32 %v228, %v229
  %v231 = vand.u32 %v230, 4294901760
  %232 = vmatmul.f32.gmra.mxu0 %v231
  %v233 = vpop.f32.mrf.mxu0
  %v234 = vadd.f32 %v192, %v233
  %235 = vdwg.mxu0
  %236 = vmatpush.msra.mxu0 0.0
  %237 = vmatpush.msra.mxu0 0.0
  %238 = vmatpush.msra.mxu0 0.0
  %239 = vmatpush.msra.mxu0 0.0
  %240 = vmatpush.msra.mxu0 0.0
  %241 = vmatpush.msra.mxu0 0.0
  %242 = vmatpush.msra.mxu0 0.0
  %243 = vmatpush.msra.mxu0 0.0
  %244 = vmatpush.msra.mxu0 0.0
  %245 = vmatpush.msra.mxu0 0.0
  %246 = vmatpush.msra.mxu0 0.0
  %247 = vmatpush.msra.mxu0 0.0
  %248 = vmatpush.msra.mxu0 0.0
  %249 = vmatpush.msra.mxu0 0.0
  %v250 = vand.u32 %v168, 4294901760
  %v251 = vsub.f32 %v168, %v250
  %v252 = vand.u32 %v251, 4294901760
  %v253 = vsub.f32 %v251, %v252
  %v254 = vand.u32 %v253, 4294901760
  %255 = vmatpush.msra.mxu0 %v254
  %v256 = vand.u32 %v138, 4294901760
  %v257 = vsub.f32 %v138, %v256
  %v258 = vand.u32 %v257, 4294901760
  %v259 = vsub.f32 %v257, %v258
  %v260 = vand.u32 %v259, 4294901760
  %261 = vmatpush.msra.mxu0 %v260
  %v262 = vand.u32 %v196, 4294901760
  %263 = vmatmul.f32.gmra.mxu0 %v262
  %v264 = vpop.f32.mrf.mxu0
  %v265 = vadd.f32 %v226, %v264
  %v266 = vand.u32 %v199, 4294901760
  %267 = vmatmul.f32.gmra.mxu0 %v266
  %v268 = vpop.f32.mrf.mxu0
  %v269 = vadd.f32 %v234, %v268
  %270 = vdwg.mxu0
  %271 = vmatpush.msra.mxu0 0.0
  %272 = vmatpush.msra.mxu0 0.0
  %273 = vmatpush.msra.mxu0 0.0
  %274 = vmatpush.msra.mxu0 0.0
  %275 = vmatpush.msra.mxu0 0.0
  %276 = vmatpush.msra.mxu0 0.0
  %277 = vmatpush.msra.mxu0 0.0
  %278 = vmatpush.msra.mxu0 0.0
  %279 = vmatpush.msra.mxu0 0.0
  %280 = vmatpush.msra.mxu0 0.0
  %281 = vmatpush.msra.mxu0 0.0
  %282 = vmatpush.msra.mxu0 0.0
  %283 = vmatpush.msra.mxu0 0.0
  %284 = vmatpush.msra.mxu0 0.0
  %v285 = vand.u32 %v168, 4294901760
  %v286 = vsub.f32 %v168, %v285
  %287 = vmatpush.msra.mxu0 %v286
  %v288 = vand.u32 %v138, 4294901760
  %v289 = vsub.f32 %v138, %v288
  %290 = vmatpush.msra.mxu0 %v289
  %v291 = vand.u32 %v196, 4294901760
  %v292 = vsub.f32 %v196, %v291
  %293 = vmatmul.f32.gmra.mxu0 %v292
  %v294 = vpop.f32.mrf.mxu0
  %v295 = vadd.f32 %v265, %v294
  %v296 = vand.u32 %v199, 4294901760
  %v297 = vsub.f32 %v199, %v296
  %298 = vmatmul.f32.gmra.mxu0 %v297
  %v299 = vpop.f32.mrf.mxu0
  %v300 = vadd.f32 %v269, %v299
  %301 = vdwg.mxu0
  %302 = vmatpush.msra.mxu0 0.0
  %303 = vmatpush.msra.mxu0 0.0
  %304 = vmatpush.msra.mxu0 0.0
  %305 = vmatpush.msra.mxu0 0.0
  %306 = vmatpush.msra.mxu0 0.0
  %307 = vmatpush.msra.mxu0 0.0
  %308 = vmatpush.msra.mxu0 0.0
  %309 = vmatpush.msra.mxu0 0.0
  %310 = vmatpush.msra.mxu0 0.0
  %311 = vmatpush.msra.mxu0 0.0
  %312 = vmatpush.msra.mxu0 0.0
  %313 = vmatpush.msra.mxu0 0.0
  %314 = vmatpush.msra.mxu0 0.0
  %315 = vmatpush.msra.mxu0 0.0
  %v316 = vand.u32 %v168, 4294901760
  %317 = vmatpush.msra.mxu0 %v316
  %v318 = vand.u32 %v138, 4294901760
  %319 = vmatpush.msra.mxu0 %v318
  %v320 = vand.u32 %v196, 4294901760
  %v321 = vsub.f32 %v196, %v320
  %v322 = vand.u32 %v321, 4294901760
  %323 = vmatmul.f32.gmra.mxu0 %v322
  %v324 = vpop.f32.mrf.mxu0
  %v325 = vadd.f32 %v295, %v324
  %v326 = vand.u32 %v199, 4294901760
  %v327 = vsub.f32 %v199, %v326
  %v328 = vand.u32 %v327, 4294901760
  %329 = vmatmul.f32.gmra.mxu0 %v328
  %v330 = vpop.f32.mrf.mxu0
  %v331 = vadd.f32 %v300, %v330
  %332 = vdwg.mxu0
  %333 = vmatpush.msra.mxu0 0.0
  %334 = vmatpush.msra.mxu0 0.0
  %335 = vmatpush.msra.mxu0 0.0
  %336 = vmatpush.msra.mxu0 0.0
  %337 = vmatpush.msra.mxu0 0.0
  %338 = vmatpush.msra.mxu0 0.0
  %339 = vmatpush.msra.mxu0 0.0
  %340 = vmatpush.msra.mxu0 0.0
  %341 = vmatpush.msra.mxu0 0.0
  %342 = vmatpush.msra.mxu0 0.0
  %343 = vmatpush.msra.mxu0 0.0
  %344 = vmatpush.msra.mxu0 0.0
  %345 = vmatpush.msra.mxu0 0.0
  %346 = vmatpush.msra.mxu0 0.0
  %v347 = vand.u32 %v168, 4294901760
  %v348 = vsub.f32 %v168, %v347
  %v349 = vand.u32 %v348, 4294901760
  %350 = vmatpush.msra.mxu0 %v349
  %v351 = vand.u32 %v138, 4294901760
  %v352 = vsub.f32 %v138, %v351
  %v353 = vand.u32 %v352, 4294901760
  %354 = vmatpush.msra.mxu0 %v353
  %v355 = vand.u32 %v196, 4294901760
  %356 = vmatmul.f32.gmra.mxu0 %v355
  %v357 = vpop.f32.mrf.mxu0
  %v358 = vadd.f32 %v325, %v357
  %v359 = vand.u32 %v199, 4294901760
  %360 = vmatmul.f32.gmra.mxu0 %v359
  %v361 = vpop.f32.mrf.mxu0
  %v362 = vadd.f32 %v331, %v361
  %363 = vdwg.mxu0
  %364 = vmatpush.msra.mxu0 0.0
  %365 = vmatpush.msra.mxu0 0.0
  %366 = vmatpush.msra.mxu0 0.0
  %367 = vmatpush.msra.mxu0 0.0
  %368 = vmatpush.msra.mxu0 0.0
  %369 = vmatpush.msra.mxu0 0.0
  %370 = vmatpush.msra.mxu0 0.0
  %371 = vmatpush.msra.mxu0 0.0
  %372 = vmatpush.msra.mxu0 0.0
  %373 = vmatpush.msra.mxu0 0.0
  %374 = vmatpush.msra.mxu0 0.0
  %375 = vmatpush.msra.mxu0 0.0
  %376 = vmatpush.msra.mxu0 0.0
  %377 = vmatpush.msra.mxu0 0.0
  %v378 = vand.u32 %v168, 4294901760
  %379 = vmatpush.msra.mxu0 %v378
  %v380 = vand.u32 %v138, 4294901760
  %381 = vmatpush.msra.mxu0 %v380
  %v382 = vand.u32 %v196, 4294901760
  %383 = vmatmul.f32.gmra.mxu0 %v382
  %v384 = vpop.f32.mrf.mxu0
  %v385 = vadd.f32 %v358, %v384
  %v386 = vand.u32 %v199, 4294901760
  %387 = vmatmul.f32.gmra.mxu0 %v386
  %v388 = vpop.f32.mrf.mxu0
  %v389 = vadd.f32 %v362, %v388
  %390 = vdwg.mxu0
  %391 = vmatpush.msra.mxu0 0.0
  %392 = vmatpush.msra.mxu0 0.0
  %393 = vmatpush.msra.mxu0 0.0
  %394 = vmatpush.msra.mxu0 0.0
  %395 = vmatpush.msra.mxu0 0.0
  %396 = vmatpush.msra.mxu0 0.0
  %397 = vmatpush.msra.mxu0 0.0
  %398 = vmatpush.msra.mxu0 0.0
  %399 = vmatpush.msra.mxu0 0.0
  %400 = vmatpush.msra.mxu0 0.0
  %401 = vmatpush.msra.mxu0 0.0
  %402 = vmatpush.msra.mxu0 0.0
  %403 = vmatpush.msra.mxu0 0.0
  %404 = vmatpush.msra.mxu0 0.0
  %v405 = vand.u32 %v183, 4294901760
  %406 = vmatpush.msra.mxu0 %v405
  %v407 = vand.u32 %v153, 4294901760
  %408 = vmatpush.msra.mxu0 %v407
  %v409 = vand.u32 %v196, 4294901760
  %v410 = vsub.f32 %v196, %v409
  %v411 = vand.u32 %v410, 4294901760
  %v412 = vsub.f32 %v410, %v411
  %v413 = vand.u32 %v412, 4294901760
  %414 = vmatmul.f32.gmra.mxu0 %v413
  %v415 = vpop.f32.mrf.mxu0
  %v416 = vadd.f32 %v187, %v415
  %v417 = vand.u32 %v199, 4294901760
  %v418 = vsub.f32 %v199, %v417
  %v419 = vand.u32 %v418, 4294901760
  %v420 = vsub.f32 %v418, %v419
  %v421 = vand.u32 %v420, 4294901760
  %422 = vmatmul.f32.gmra.mxu0 %v421
  %v423 = vpop.f32.mrf.mxu0
  %v424 = vadd.f32 %v192, %v423
  %425 = vdwg.mxu0
  %426 = vmatpush.msra.mxu0 0.0
  %427 = vmatpush.msra.mxu0 0.0
  %428 = vmatpush.msra.mxu0 0.0
  %429 = vmatpush.msra.mxu0 0.0
  %430 = vmatpush.msra.mxu0 0.0
  %431 = vmatpush.msra.mxu0 0.0
  %432 = vmatpush.msra.mxu0 0.0
  %433 = vmatpush.msra.mxu0 0.0
  %434 = vmatpush.msra.mxu0 0.0
  %435 = vmatpush.msra.mxu0 0.0
  %436 = vmatpush.msra.mxu0 0.0
  %437 = vmatpush.msra.mxu0 0.0
  %438 = vmatpush.msra.mxu0 0.0
  %439 = vmatpush.msra.mxu0 0.0
  %v440 = vand.u32 %v183, 4294901760
  %v441 = vsub.f32 %v183, %v440
  %v442 = vand.u32 %v441, 4294901760
  %v443 = vsub.f32 %v441, %v442
  %v444 = vand.u32 %v443, 4294901760
  %445 = vmatpush.msra.mxu0 %v444
  %v446 = vand.u32 %v153, 4294901760
  %v447 = vsub.f32 %v153, %v446
  %v448 = vand.u32 %v447, 4294901760
  %v449 = vsub.f32 %v447, %v448
  %v450 = vand.u32 %v449, 4294901760
  %451 = vmatpush.msra.mxu0 %v450
  %v452 = vand.u32 %v196, 4294901760
  %453 = vmatmul.f32.gmra.mxu0 %v452
  %v454 = vpop.f32.mrf.mxu0
  %v455 = vadd.f32 %v416, %v454
  %v456 = vand.u32 %v199, 4294901760
  %457 = vmatmul.f32.gmra.mxu0 %v456
  %v458 = vpop.f32.mrf.mxu0
  %v459 = vadd.f32 %v424, %v458
  %460 = vdwg.mxu0
  %461 = vmatpush.msra.mxu0 0.0
  %462 = vmatpush.msra.mxu0 0.0
  %463 = vmatpush.msra.mxu0 0.0
  %464 = vmatpush.msra.mxu0 0.0
  %465 = vmatpush.msra.mxu0 0.0
  %466 = vmatpush.msra.mxu0 0.0
  %467 = vmatpush.msra.mxu0 0.0
  %468 = vmatpush.msra.mxu0 0.0
  %469 = vmatpush.msra.mxu0 0.0
  %470 = vmatpush.msra.mxu0 0.0
  %471 = vmatpush.msra.mxu0 0.0
  %472 = vmatpush.msra.mxu0 0.0
  %473 = vmatpush.msra.mxu0 0.0
  %474 = vmatpush.msra.mxu0 0.0
  %v475 = vand.u32 %v183, 4294901760
  %v476 = vsub.f32 %v183, %v475
  %477 = vmatpush.msra.mxu0 %v476
  %v478 = vand.u32 %v153, 4294901760
  %v479 = vsub.f32 %v153, %v478
  %480 = vmatpush.msra.mxu0 %v479
  %v481 = vand.u32 %v196, 4294901760
  %v482 = vsub.f32 %v196, %v481
  %483 = vmatmul.f32.gmra.mxu0 %v482
  %v484 = vpop.f32.mrf.mxu0
  %v485 = vadd.f32 %v455, %v484
  %v486 = vand.u32 %v199, 4294901760
  %v487 = vsub.f32 %v199, %v486
  %488 = vmatmul.f32.gmra.mxu0 %v487
  %v489 = vpop.f32.mrf.mxu0
  %v490 = vadd.f32 %v459, %v489
  %491 = vdwg.mxu0
  %492 = vmatpush.msra.mxu0 0.0
  %493 = vmatpush.msra.mxu0 0.0
  %494 = vmatpush.msra.mxu0 0.0
  %495 = vmatpush.msra.mxu0 0.0
  %496 = vmatpush.msra.mxu0 0.0
  %497 = vmatpush.msra.mxu0 0.0
  %498 = vmatpush.msra.mxu0 0.0
  %499 = vmatpush.msra.mxu0 0.0
  %500 = vmatpush.msra.mxu0 0.0
  %501 = vmatpush.msra.mxu0 0.0
  %502 = vmatpush.msra.mxu0 0.0
  %503 = vmatpush.msra.mxu0 0.0
  %504 = vmatpush.msra.mxu0 0.0
  %505 = vmatpush.msra.mxu0 0.0
  %v506 = vand.u32 %v183, 4294901760
  %507 = vmatpush.msra.mxu0 %v506
  %v508 = vand.u32 %v153, 4294901760
  %509 = vmatpush.msra.mxu0 %v508
  %v510 = vand.u32 %v196, 4294901760
  %v511 = vsub.f32 %v196, %v510
  %v512 = vand.u32 %v511, 4294901760
  %513 = vmatmul.f32.gmra.mxu0 %v512
  %v514 = vpop.f32.mrf.mxu0
  %v515 = vadd.f32 %v485, %v514
  %v516 = vand.u32 %v199, 4294901760
  %v517 = vsub.f32 %v199, %v516
  %v518 = vand.u32 %v517, 4294901760
  %519 = vmatmul.f32.gmra.mxu0 %v518
  %v520 = vpop.f32.mrf.mxu0
  %v521 = vadd.f32 %v490, %v520
  %522 = vdwg.mxu0
  %523 = vmatpush.msra.mxu0 0.0
  %524 = vmatpush.msra.mxu0 0.0
  %525 = vmatpush.msra.mxu0 0.0
  %526 = vmatpush.msra.mxu0 0.0
  %527 = vmatpush.msra.mxu0 0.0
  %528 = vmatpush.msra.mxu0 0.0
  %529 = vmatpush.msra.mxu0 0.0
  %530 = vmatpush.msra.mxu0 0.0
  %531 = vmatpush.msra.mxu0 0.0
  %532 = vmatpush.msra.mxu0 0.0
  %533 = vmatpush.msra.mxu0 0.0
  %534 = vmatpush.msra.mxu0 0.0
  %535 = vmatpush.msra.mxu0 0.0
  %536 = vmatpush.msra.mxu0 0.0
  %v537 = vand.u32 %v183, 4294901760
  %v538 = vsub.f32 %v183, %v537
  %v539 = vand.u32 %v538, 4294901760
  %540 = vmatpush.msra.mxu0 %v539
  %v541 = vand.u32 %v153, 4294901760
  %v542 = vsub.f32 %v153, %v541
  %v543 = vand.u32 %v542, 4294901760
  %544 = vmatpush.msra.mxu0 %v543
  %v545 = vand.u32 %v196, 4294901760
  %546 = vmatmul.f32.gmra.mxu0 %v545
  %v547 = vpop.f32.mrf.mxu0
  %v548 = vadd.f32 %v515, %v547
  %v549 = vand.u32 %v199, 4294901760
  %550 = vmatmul.f32.gmra.mxu0 %v549
  %v551 = vpop.f32.mrf.mxu0
  %v552 = vadd.f32 %v521, %v551
  %553 = vdwg.mxu0
  %554 = vmatpush.msra.mxu0 0.0
  %555 = vmatpush.msra.mxu0 0.0
  %556 = vmatpush.msra.mxu0 0.0
  %557 = vmatpush.msra.mxu0 0.0
  %558 = vmatpush.msra.mxu0 0.0
  %559 = vmatpush.msra.mxu0 0.0
  %560 = vmatpush.msra.mxu0 0.0
  %561 = vmatpush.msra.mxu0 0.0
  %562 = vmatpush.msra.mxu0 0.0
  %563 = vmatpush.msra.mxu0 0.0
  %564 = vmatpush.msra.mxu0 0.0
  %565 = vmatpush.msra.mxu0 0.0
  %566 = vmatpush.msra.mxu0 0.0
  %567 = vmatpush.msra.mxu0 0.0
  %v568 = vand.u32 %v183, 4294901760
  %569 = vmatpush.msra.mxu0 %v568
  %v570 = vand.u32 %v153, 4294901760
  %571 = vmatpush.msra.mxu0 %v570
  %v572 = vand.u32 %v196, 4294901760
  %573 = vmatmul.f32.gmra.mxu0 %v572
  %v574 = vpop.f32.mrf.mxu0
  %v575 = vadd.f32 %v548, %v574
  %v576 = vand.u32 %v199, 4294901760
  %577 = vmatmul.f32.gmra.mxu0 %v576
  %v578 = vpop.f32.mrf.mxu0
  %v579 = vadd.f32 %v552, %v578
  %580 = vdwg.mxu0
  %v581 = vxor.u32 %v385, 2147483648
  %v582 = vxor.u32 %v575, 2147483648
  %v583 = vxor.u32 %v389, 2147483648
  %v584 = vxor.u32 %v579, 2147483648
  %v585 = vmul.f32 %v581, 1.442695
  %v586 = vpow.pop %v585
  %v587 = vmul.f32 %v582, 1.442695
  %v588 = vpow.pop %v587
  %v589 = vmul.f32 %v583, 1.442695
  %v590 = vpow.pop %v589
  %v591 = vmul.f32 %v584, 1.442695
  %v592 = vpow.pop %v591
  %v593 = vadd.f32 %v586, 1.0
  %v594 = vadd.f32 %v588, 1.0
  %v595 = vadd.f32 %v590, 1.0
  %v596 = vadd.f32 %v592, 1.0
  %v597 = vrcp.pop %v593
  %v598 = vmul.f32 %v593, %v597
  %v599 = vsub.f32 1.0, %v598
  %v600 = vmul.f32 %v597, %v599
  %v601 = vadd.f32 %v597, %v600
  %vm602 = vweird.f32 %v593
  %vm603 = vweird.f32 %v597
  %vm604 = vmor %vm602, %vm603
  %v605 = vsel %vm604, %v597, %v601
  %v606 = vand.u32 2147483647, %v593
  %vm607 = vcmp.eq.f32.partialorder %v606, 8.507059e+37
  %v608 = vand.u32 %v593, 2147483648
  %v609 = vor.u32 1.1754944e-38, %v608
  %v610 = vsel %vm607, %v609, %v605
  %v611 = vmul.f32 1.0, %v610
  %v612 = vrcp.pop %v594
  %v613 = vmul.f32 %v594, %v612
  %v614 = vsub.f32 1.0, %v613
  %v615 = vmul.f32 %v612, %v614
  %v616 = vadd.f32 %v612, %v615
  %vm617 = vweird.f32 %v594
  %vm618 = vweird.f32 %v612
  %vm619 = vmor %vm617, %vm618
  %v620 = vsel %vm619, %v612, %v616
  %v621 = vand.u32 2147483647, %v594
  %vm622 = vcmp.eq.f32.partialorder %v621, 8.507059e+37
  %v623 = vand.u32 %v594, 2147483648
  %v624 = vor.u32 1.1754944e-38, %v623
  %v625 = vsel %vm622, %v624, %v620
  %v626 = vmul.f32 1.0, %v625
  %v627 = vrcp.pop %v595
  %v628 = vmul.f32 %v595, %v627
  %v629 = vsub.f32 1.0, %v628
  %v630 = vmul.f32 %v627, %v629
  %v631 = vadd.f32 %v627, %v630
  %vm632 = vweird.f32 %v595
  %vm633 = vweird.f32 %v627
  %vm634 = vmor %vm632, %vm633
  %v635 = vsel %vm634, %v627, %v631
  %v636 = vand.u32 2147483647, %v595
  %vm637 = vcmp.eq.f32.partialorder %v636, 8.507059e+37
  %v638 = vand.u32 %v595, 2147483648
  %v639 = vor.u32 1.1754944e-38, %v638
  %v640 = vsel %vm637, %v639, %v635
  %v641 = vmul.f32 1.0, %v640
  %v642 = vrcp.pop %v596
  %v643 = vmul.f32 %v596, %v642
  %v644 = vsub.f32 1.0, %v643
  %v645 = vmul.f32 %v642, %v644
  %v646 = vadd.f32 %v642, %v645
  %vm647 = vweird.f32 %v596
  %vm648 = vweird.f32 %v642
  %vm649 = vmor %vm647, %vm648
  %v650 = vsel %vm649, %v642, %v646
  %v651 = vand.u32 2147483647, %v596
  %vm652 = vcmp.eq.f32.partialorder %v651, 8.507059e+37
  %v653 = vand.u32 %v596, 2147483648
  %v654 = vor.u32 1.1754944e-38, %v653
  %v655 = vsel %vm652, %v654, %v650
  %v656 = vmul.f32 1.0, %v655
  %657 = vst [vmem:[%s5] sm:$0xff] %v611
  %658 = vst [vmem:[%s5 + $0x8] sm:$0xff] %v626
  %659 = vst [vmem:[%s5 + $0x10] sm:$0xff] %v641
  %660 = vst [vmem:[%s5 + $0x18] sm:$0xff] %v656
  // Predicated region
  $region22: #{model_forward.1} parent=0 // pred_check
    _
  $region23: #{model_forward.1} parent=0 // pred_check_branch
    %662 = sbr.rel (0) target = $region25
  $region24: #{model_forward.1} parent=0 // pred_region
    _
  $region25: #{model_forward.1} parent=0 // pred_fallthru
    _
  // Predicated region
  $region26: #{model_forward.1} parent=0 // pred_check
    _
  $region27: #{model_forward.1} parent=0 // pred_check_branch
    %664 = sbr.rel (0) target = $region29
  $region28: #{model_forward.1} parent=0 // pred_region
    _
  $region29: #{model_forward.1} parent=0 // pred_fallthru
    _

</llo_original>
